<compile_context>
chip_gen: v5e
topology: v5e:2x2
jax: 0.10.0
libtpu: 0.0.40
codegen_flags: <defaults>
</compile_context>

<pallas_src>
import jax
import jax.numpy as jnp
from jax.experimental import pallas as pl
from jax.experimental.pallas import tpu as pltpu


def _round_up(n, m):
    return ((n + m - 1) // m) * m


def fusion_mlp_kernel(x_ref, w1_ref, b1_ref, w2_ref, b2_ref, w3_ref, b3_ref, o_ref):
    # x tile: (tb, D), batch on sublanes, features on lanes.  Cast to bf16 in
    # kernel so the MXU runs in its native input format (f32 is multi-pass).
    x_bf = x_ref[...].astype(jnp.bfloat16)

    # Layer 1: h1_T = W1 @ x^T -> (H1, tb).  Contraction over the last dim of
    # both operands (A @ B^T) uses the MXU transposed-RHS form; no explicit
    # transpose/relayout of the activation tile is materialized.
    h1 = jax.lax.dot_general(
        w1_ref[...], x_bf, (((1,), (1,)), ((), ())),
        preferred_element_type=jnp.float32)
    h1 = jnp.maximum(h1 + b1_ref[...], 0.0)          # (H1,1) bias broadcasts on lanes

    # Dropout(0.2): identity at inference time.
    # TODO(synk): training-mode dropout (pltpu.prng_random_bits mask) not implemented.

    # Layer 2: h2_T = W2 @ h1_T -> (H2, tb).  Feed the MXU bf16, accumulate f32.
    h2 = jnp.dot(w2_ref[...], h1.astype(jnp.bfloat16),
                 preferred_element_type=jnp.float32)
    h2 = jnp.maximum(h2 + b2_ref[...], 0.0)

    # Layer 3 (out_features = 1): VPU multiply + sublane reduction instead of a
    # degenerate (64, 1) MXU matmul.  Result is (1, tb) with batch on lanes.
    logits = jnp.sum(h2 * w3_ref[...], axis=0, keepdims=True) + b3_ref[...]

    # Lane-dense store: (1, 1, tb) block, one contiguous unmasked DMA.
    o_ref[...] = jax.nn.sigmoid(logits)[None].astype(o_ref.dtype)


def _choose_tile(B, D, itemsize, H1, H2, tile_b):
    """Batch-tile size: big, lane-granular, >=2 grid steps, VMEM-budgeted."""
    # Keep >= 2 grid steps when the batch allows (v7x megacore sharding).
    tb = min(int(tile_b), _round_up((B + 1) // 2, 8))
    # Keep the per-step working set (double-buffered x tile + f32/bf16
    # intermediates + output rows) within ~24 MiB -> safe on v7x's 64 MiB VMEM.
    budget = 24 * 1024 * 1024
    per_row = (2 * D * itemsize            # x double buffer
               + (H1 + H2 + 1) * 4         # f32 intermediates (h1, h2, logits)
               + (D + H1) * 2              # bf16 copies of x tile and h1
               + 2 * 4)                    # double-buffered output row
    tb = min(tb, max(8, budget // max(per_row, 1)))
    # Round to lane / MXU granularity: prefer 256, then 128, else 8.
    for g in (256, 128, 8):
        if tb >= g:
            tb -= tb % g
            break
    return max(tb, 8)


def _mlp_pallas_call(x, w1_bf, b1c, w2_bf, b2c, w3c, b3c, *, tb):
    """Run the fused MLP on x of shape (n_tiles*tb, D); returns (B, 1)."""
    B, D = x.shape
    assert B % tb == 0
    n_tiles = B // tb
    H1 = w1_bf.shape[0]
    H2 = w2_bf.shape[0]
    x_bytes = jnp.dtype(x.dtype).itemsize
    out_bytes = jnp.dtype(x.dtype).itemsize

    # VMEM budget computed from the actual footprint (+50% headroom), instead
    # of a blanket constant: double-buffered x tiles and output rows, resident
    # bf16 weights / f32 biases, and f32 + bf16 intermediates.
    footprint = (2 * tb * D * x_bytes
                 + 2 * tb * out_bytes
                 + 2 * ((H1 * D + H2 * H1) * 2 + (H1 + 2 * H2 + 1) * 4)
                 + (H1 + H2 + 1) * tb * 4
                 + (tb * D + H1 * tb) * 2)
    vmem_limit = int(min(max(footprint * 1.5 + (1 << 20), 4 << 20), 48 << 20))

    cost = pl.CostEstimate(
        flops=2 * B * (D * H1 + H1 * H2 + H2),
        transcendentals=B,
        bytes_accessed=(B * D * x_bytes
                        + (H1 * D + H2 * H1) * 2
                        + (H1 + 2 * H2 + 1) * 4
                        + B * out_bytes),
    )

    out = pl.pallas_call(
        fusion_mlp_kernel,
        out_shape=jax.ShapeDtypeStruct((n_tiles, 1, tb), x.dtype),
        grid_spec=pltpu.PrefetchScalarGridSpec(
            num_scalar_prefetch=0,
            grid=(n_tiles,),
            in_specs=[
                pl.BlockSpec((tb, D), lambda i: (i, 0)),    # x tile (batch on sublanes)
                pl.BlockSpec((H1, D), lambda i: (0, 0)),    # W1 (out, in), bf16
                pl.BlockSpec((H1, 1), lambda i: (0, 0)),    # b1 column, f32
                pl.BlockSpec((H2, H1), lambda i: (0, 0)),   # W2 (out, in), bf16
                pl.BlockSpec((H2, 1), lambda i: (0, 0)),    # b2 column, f32
                pl.BlockSpec((H2, 1), lambda i: (0, 0)),    # w3 column, f32
                pl.BlockSpec((1, 1), lambda i: (0, 0)),     # b3 scalar, f32
            ],
            out_specs=pl.BlockSpec((1, 1, tb), lambda i: (i, 0, 0)),  # lane-dense
        ),
        compiler_params=pltpu.CompilerParams(
            dimension_semantics=("parallel",),   # megacore sharding on v7x
            vmem_limit_bytes=vmem_limit,
        ),
        cost_estimate=cost,
    )(x, w1_bf, b1c, w2_bf, b2c, w3c, b3c)

    # (n_tiles, 1, tb) row-major -> (B, 1): tile-major then lane == batch order.
    return out.reshape(B, 1)


def fusion_mlp(x, w1, b1, w2, b2, w3, b3, *, tile_b=2048):
    """Fused MLP forward.

    x  : (B, D)
    w1 : (128, D)   b1 : (128,)      -- PyTorch (out, in) layout
    w2 : (64, 128)  b2 : (64,)
    w3 : (1, 64)    b3 : (1,)
    returns (B, 1)
    """
    B, D = x.shape
    H1 = w1.shape[0]
    H2 = w2.shape[0]
    assert w1.shape == (H1, D) and w2.shape == (H2, H1) and w3.shape == (1, H2)

    # bf16 weights feed the MXU natively; biases / reduction vector stay f32.
    w1_bf = w1.astype(jnp.bfloat16)
    w2_bf = w2.astype(jnp.bfloat16)
    b1c = b1.reshape(H1, 1).astype(jnp.float32)
    b2c = b2.reshape(H2, 1).astype(jnp.float32)
    w3c = w3.reshape(H2, 1).astype(jnp.float32)
    b3c = b3.reshape(1, 1).astype(jnp.float32)
    params = (w1_bf, b1c, w2_bf, b2c, w3c, b3c)

    tb = _choose_tile(B, D, jnp.dtype(x.dtype).itemsize, H1, H2, tile_b)
    n_main = B // tb
    b_main = n_main * tb
    tail = B - b_main

    outs = []
    if n_main > 0:
        # Divisible prefix: zero-copy when B % tb == 0; contiguous-prefix slice
        # otherwise (never a full padded copy of x).
        x_main = x if tail == 0 else x[:b_main]
        outs.append(_mlp_pallas_call(x_main, *params, tb=tb))
    if tail > 0:
        # < tb-row tail: tiny second launch, padded by at most 7 rows.
        tb_t = _round_up(tail, 8)
        x_t = x[b_main:]
        if tb_t != tail:
            x_t = jnp.pad(x_t, ((0, tb_t - tail), (0, 0)))
        outs.append(_mlp_pallas_call(x_t, *params, tb=tb_t)[:tail])
    return outs[0] if len(outs) == 1 else jnp.concatenate(outs, axis=0)


def init_linear(key, fan_in, fan_out, dtype=jnp.float32):
    """PyTorch-style uniform(-1/sqrt(fan_in), 1/sqrt(fan_in)); weight (out, in)."""
    kw, kb = jax.random.split(key)
    bound = 1.0 / jnp.sqrt(float(fan_in))
    w = jax.random.uniform(kw, (fan_out, fan_in), dtype, minval=-bound, maxval=bound)
    b = jax.random.uniform(kb, (fan_out,), dtype, minval=-bound, maxval=bound)
    return w, b


def _reference(x, w1, b1, w2, b2, w3, b3):
    h = jnp.maximum(x @ w1.T + b1, 0.0)
    h = jnp.maximum(h @ w2.T + b2, 0.0)
    return jax.nn.sigmoid(h @ w3.T + b3)


if __name__ == "__main__":
    key = jax.random.PRNGKey(0)
    k_x, k1, k2, k3 = jax.random.split(key, 4)

    D = 32
    w1, b1 = init_linear(k1, D, 128)
    w2, b2 = init_linear(k2, 128, 64)
    w3, b3 = init_linear(k3, 64, 1)

    # bf16 MXU inputs -> validate against the f32 reference with ~1e-2 tolerance.
    TOL = dict(atol=2e-2, rtol=2e-2)

    # Case 1: small batch, explicit small tile -> 2 grid steps, divisible path
    # (exercises the multi-step / megacore path with no extra copies).
    B = 16
    x = jax.random.normal(k_x, (B, D), jnp.float32)
    out = jax.block_until_ready(fusion_mlp(x, w1, b1, w2, b2, w3, b3, tile_b=8))
    ref = _reference(x, w1, b1, w2, b2, w3, b3)
    assert out.shape == (B, 1)
    assert jnp.allclose(out, ref, **TOL)

    # Case 2: ragged batch with the default (large) tile -> exercises the
    # prefix-call + tiny-tail-call path (no whole-array pad of x).
    B2 = 10
    x2 = jax.random.normal(jax.random.PRNGKey(7), (B2, D), jnp.float32)
    out2 = jax.block_until_ready(fusion_mlp(x2, w1, b1, w2, b2, w3, b3))
    ref2 = _reference(x2, w1, b1, w2, b2, w3, b3)
    assert out2.shape == (B2, 1)
    assert jnp.allclose(out2, ref2, **TOL)

    print("KERNEL_OK")
</pallas_src>

<mosaic_0001>
module attributes {stable_mosaic.version = 11 : i64} {
  func.func @fusion_mlp_kernel(%arg0: i32, %arg1: memref<8x32xf32, #tpu.memory_space<vmem>>, %arg2: memref<128x32xbf16, #tpu.memory_space<vmem>>, %arg3: memref<128x1xf32, #tpu.memory_space<vmem>>, %arg4: memref<64x128xbf16, #tpu.memory_space<vmem>>, %arg5: memref<64x1xf32, #tpu.memory_space<vmem>>, %arg6: memref<64x1xf32, #tpu.memory_space<vmem>>, %arg7: memref<1x1xf32, #tpu.memory_space<vmem>>, %arg8: memref<1x1x8xf32, #tpu.memory_space<vmem>>) attributes {dimension_semantics = [#tpu.dimension_semantics<parallel>], iteration_bounds = array<i64: 2>, scalar_prefetch = 0 : i64, scratch_operands = 0 : i64, tpu.core_type = #tpu.core_type<tc>, window_params = [{transform_indices = @transform_0, window_bounds = array<i64: 8, 32>}, {pipeline_mode = #tpu.pipeline_mode<synchronous>, transform_indices = @transform_1, window_bounds = array<i64: 128, 32>}, {pipeline_mode = #tpu.pipeline_mode<synchronous>, transform_indices = @transform_2, window_bounds = array<i64: 128, 1>}, {pipeline_mode = #tpu.pipeline_mode<synchronous>, transform_indices = @transform_3, window_bounds = array<i64: 64, 128>}, {pipeline_mode = #tpu.pipeline_mode<synchronous>, transform_indices = @transform_4, window_bounds = array<i64: 64, 1>}, {pipeline_mode = #tpu.pipeline_mode<synchronous>, transform_indices = @transform_5, window_bounds = array<i64: 64, 1>}, {pipeline_mode = #tpu.pipeline_mode<synchronous>, transform_indices = @transform_6, window_bounds = array<i64: 1, 1>}, {transform_indices = @transform_7, window_bounds = array<i64: 1, 1, 8>}]} {
    %c0 = arith.constant 0 : index
    %c0_0 = arith.constant 0 : index
    %0 = vector.load %arg1[%c0, %c0_0] : memref<8x32xf32, #tpu.memory_space<vmem>>, vector<8x32xf32>
    %1 = arith.truncf %0 : vector<8x32xf32> to vector<8x32xbf16>
    %c0_1 = arith.constant 0 : index
    %c0_2 = arith.constant 0 : index
    %2 = vector.load %arg2[%c0_1, %c0_2] : memref<128x32xbf16, #tpu.memory_space<vmem>>, vector<128x32xbf16>
    %cst = arith.constant dense<0.000000e+00> : vector<128x8xf32>
    %3 = tpu.matmul %2, %1, %cst {dimension_numbers = #tpu.dot_dimension_numbers<[1], [1], [0], [0], [0, 0, 1, 0], [], []>} : vector<128x32xbf16>, vector<8x32xbf16>, vector<128x8xf32> -> vector<128x8xf32>
    %c0_3 = arith.constant 0 : index
    %c0_4 = arith.constant 0 : index
    %4 = vector.load %arg3[%c0_3, %c0_4] : memref<128x1xf32, #tpu.memory_space<vmem>>, vector<128x1xf32>
    %5 = vector.broadcast %4 : vector<128x1xf32> to vector<128x8xf32>
    %6 = arith.addf %3, %5 : vector<128x8xf32>
    %cst_5 = arith.constant 0.000000e+00 : f32
    %7 = vector.broadcast %cst_5 : f32 to vector<128x8xf32>
    %8 = arith.maximumf %6, %7 : vector<128x8xf32>
    %c0_6 = arith.constant 0 : index
    %c0_7 = arith.constant 0 : index
    %9 = vector.load %arg4[%c0_6, %c0_7] : memref<64x128xbf16, #tpu.memory_space<vmem>>, vector<64x128xbf16>
    %10 = arith.truncf %8 : vector<128x8xf32> to vector<128x8xbf16>
    %cst_8 = arith.constant dense<0.000000e+00> : vector<64x8xf32>
    %11 = tpu.matmul %9, %10, %cst_8 {dimension_numbers = #tpu.dot_dimension_numbers<[1], [0], [0], [1], [0, 0, 1, 1], [], []>} : vector<64x128xbf16>, vector<128x8xbf16>, vector<64x8xf32> -> vector<64x8xf32>
    %c0_9 = arith.constant 0 : index
    %c0_10 = arith.constant 0 : index
    %12 = vector.load %arg5[%c0_9, %c0_10] : memref<64x1xf32, #tpu.memory_space<vmem>>, vector<64x1xf32>
    %13 = vector.broadcast %12 : vector<64x1xf32> to vector<64x8xf32>
    %14 = arith.addf %11, %13 : vector<64x8xf32>
    %cst_11 = arith.constant 0.000000e+00 : f32
    %15 = vector.broadcast %cst_11 : f32 to vector<64x8xf32>
    %16 = arith.maximumf %14, %15 : vector<64x8xf32>
    %c0_12 = arith.constant 0 : index
    %c0_13 = arith.constant 0 : index
    %17 = vector.load %arg6[%c0_12, %c0_13] : memref<64x1xf32, #tpu.memory_space<vmem>>, vector<64x1xf32>
    %18 = vector.broadcast %17 : vector<64x1xf32> to vector<64x8xf32>
    %19 = arith.mulf %16, %18 : vector<64x8xf32>
    %cst_14 = arith.constant dense<0.000000e+00> : vector<8xf32>
    %20 = vector.multi_reduction <add>, %19, %cst_14 [0] : vector<64x8xf32> to vector<8xf32>
    %21 = vector.shape_cast %20 : vector<8xf32> to vector<1x8xf32>
    %c0_15 = arith.constant 0 : index
    %c0_16 = arith.constant 0 : index
    %22 = vector.load %arg7[%c0_15, %c0_16] : memref<1x1xf32, #tpu.memory_space<vmem>>, vector<1x1xf32>
    %23 = vector.broadcast %22 : vector<1x1xf32> to vector<1x8xf32>
    %24 = arith.addf %21, %23 : vector<1x8xf32>
    %25 = arith.negf %24 : vector<1x8xf32>
    %26 = math.exp %25 : vector<1x8xf32>
    %cst_17 = arith.constant 1.000000e+00 : f32
    %27 = vector.broadcast %cst_17 : f32 to vector<1x8xf32>
    %28 = arith.addf %27, %26 : vector<1x8xf32>
    %29 = arith.divf %27, %28 : vector<1x8xf32>
    %30 = vector.shape_cast %29 : vector<1x8xf32> to vector<1x1x8xf32>
    %c0_18 = arith.constant 0 : index
    %c0_19 = arith.constant 0 : index
    %c0_20 = arith.constant 0 : index
    %31 = vector.load %arg8[%c0_18, %c0_19, %c0_20] : memref<1x1x8xf32, #tpu.memory_space<vmem>>, vector<1x1x8xf32>
    tpu.vector_store %arg8[%c0_18, %c0_19, %c0_20], %30 {strides = array<i32>} : memref<1x1x8xf32, #tpu.memory_space<vmem>>, vector<1x1x8xf32>,
    return
  }
  func.func @transform_0(%arg0: i32) -> (i32, i32) {
    %c0_i32 = arith.constant 0 : i32
    %c0_i32_0 = arith.constant 0 : i32
    return %arg0, %c0_i32 : i32, i32
  }
  func.func @transform_1(%arg0: i32) -> (i32, i32) {
    %c0_i32 = arith.constant 0 : i32
    %c0_i32_0 = arith.constant 0 : i32
    %c0_i32_1 = arith.constant 0 : i32
    return %c0_i32, %c0_i32_0 : i32, i32
  }
  func.func @transform_2(%arg0: i32) -> (i32, i32) {
    %c0_i32 = arith.constant 0 : i32
    %c0_i32_0 = arith.constant 0 : i32
    %c0_i32_1 = arith.constant 0 : i32
    return %c0_i32, %c0_i32_0 : i32, i32
  }
  func.func @transform_3(%arg0: i32) -> (i32, i32) {
    %c0_i32 = arith.constant 0 : i32
    %c0_i32_0 = arith.constant 0 : i32
    %c0_i32_1 = arith.constant 0 : i32
    return %c0_i32, %c0_i32_0 : i32, i32
  }
  func.func @transform_4(%arg0: i32) -> (i32, i32) {
    %c0_i32 = arith.constant 0 : i32
    %c0_i32_0 = arith.constant 0 : i32
    %c0_i32_1 = arith.constant 0 : i32
    return %c0_i32, %c0_i32_0 : i32, i32
  }
  func.func @transform_5(%arg0: i32) -> (i32, i32) {
    %c0_i32 = arith.constant 0 : i32
    %c0_i32_0 = arith.constant 0 : i32
    %c0_i32_1 = arith.constant 0 : i32
    return %c0_i32, %c0_i32_0 : i32, i32
  }
  func.func @transform_6(%arg0: i32) -> (i32, i32) {
    %c0_i32 = arith.constant 0 : i32
    %c0_i32_0 = arith.constant 0 : i32
    %c0_i32_1 = arith.constant 0 : i32
    return %c0_i32, %c0_i32_0 : i32, i32
  }
  func.func @transform_7(%arg0: i32) -> (i32, i32, i32) {
    %c0_i32 = arith.constant 0 : i32
    %c0_i32_0 = arith.constant 0 : i32
    %c0_i32_1 = arith.constant 0 : i32
    return %arg0, %c0_i32, %c0_i32_0 : i32, i32, i32
  }
}

</mosaic_0001>

<llo_original>
// kernel: tpu_custom_call.1
$region0: #{tpu_custom_call.1}
  #allocation0 [shape = 'u32[]', space=smem, size = 0x4, offset = 0x4, fixed_abs, tag = 'smem constant byte address 0x4 - core index']
  #allocation1 [shape = 'u32[72,128]{1,0:T(1,128)}', space=vmem, size = 0x9000, scoped, tag = 'internal scratch']
  #allocation2 [shape = 'f32[1,1]{1,0:T(1,128)S(1)}', space=vmem, size = 0x200, scoped, tag = 'scoped memory for tpu_custom_call.1']
  %s0 = inlined_call_operand.vmem [shape: f32[16,32], index: 0, kind: input, shape index: {}]
  %s1 = inlined_call_operand.vmem [shape: bf16[128,32], index: 1, kind: input, shape index: {}]
  %s2 = inlined_call_operand.vmem [shape: f32[128,1], index: 2, kind: input, shape index: {}]
  %s3 = inlined_call_operand.vmem [shape: bf16[64,128], index: 3, kind: input, shape index: {}]
  %s4 = inlined_call_operand.vmem [shape: f32[64,1], index: 4, kind: input, shape index: {}]
  %s5 = inlined_call_operand.vmem [shape: f32[64,1], index: 5, kind: input, shape index: {}]
  %s6 = inlined_call_operand.<no memory space> [shape: f32[1,1], index: 6, kind: input, shape index: {}]
  %s7 = inlined_call_operand.hbm [shape: f32[2,1,8], index: 7, kind: output, shape index: {}]
  %s8 = sld [smem:[#allocation0]]
  $region61: #{tpu_custom_call.1} parent=0
    _
  %s10 = ssub.s32 1, %s8
  %s11 = scalar_select 0, %s10, %s8
  %v12 = vstv %s6
  %13 = vst [vmem:[#allocation2] sm:$0x1] %v12
  $region1: #{tpu_custom_call.1} parent=0
    #allocation3 [shape = 'u8[1024]{0}', space=vmem, size = 0x400, scoped, tag = 'output window, operand 0']
    #allocation4 [shape = 's32[2]{0}', space=sflag, size = 0x8, scoped, tag = 'scoped memory for tpu_custom_call.1']
    %14 = vsyncpa [#allocation4], 0
    %s15 = scalar_lea.sflag [#allocation4], 1
    %16 = vsyncpa %s15, 0
    loop: start=0, step=1, limit=4
    $region2: #{tpu_custom_call.1} parent=1 // loop_pre_header
      _
    $region3: #{tpu_custom_call.1} parent=1 // loop_header
      %s18 = sphi 0, %s22
      %p19 = scmp.ge.s32.totalorder %s18, 4
      %s28 = sphi 0, %s30
      %s31 = sphi 0, %s28
      %s32 = sphi 0, %s31
      %s48 = sphi 0, %s32
      %s52 = sphi 0, %s52
      %s54 = sphi 0, %s52
      %s55 = sphi 0, %s54
      %s69 = sphi 0, %s55
      %s73 = sphi 0, %s73
      %s75 = sphi 0, %s73
      %s76 = sphi 0, %s75
      %s90 = sphi 0, %s76
      %s94 = sphi 0, %s94
      %s96 = sphi 0, %s94
      %s97 = sphi 0, %s96
      %s111 = sphi 0, %s97
      %s115 = sphi 0, %s115
      %s117 = sphi 0, %s115
      %s118 = sphi 0, %s117
      %s132 = sphi 0, %s118
      %s136 = sphi 0, %s136
      %s138 = sphi 0, %s136
      %s139 = sphi 0, %s138
      %s153 = sphi 0, %s139
      %s157 = sphi 0, %s157
      %s159 = sphi 0, %s157
      %s160 = sphi 0, %s159
      %s174 = sphi 0, %s160
      %s180 = sphi 0, %s182
      %s183 = sphi 0, %s180
      %s184 = sphi 0, %s183
      %s200 = sphi 0, %s184
    $region4: #{tpu_custom_call.1} parent=1 // loop_header_branch
      %21 = sbr.rel (%p19) target = $region8
    $region5: #{tpu_custom_call.1} parent=1 // loop_body
      %s23 = ssub.s32 %s18, 1
      %s24 = ssub.s32 %s18, 2
      %s25 = sadd.s32 %s18, 1
      %s26 = ssub.s32 %s18, %s25
      %p27 = scmp.eq.s32.totalorder %s26, 0
      %s29 = sadd.s32 %s28, 1
      %s30 = scalar_select %p27, %s28, %s29
      %p33 = pneg %p27
      %p34 = scmp.eq.s32.totalorder %s18, 1
      %p35 = por %p33, %p34
      %p36 = scmp.ne.s32.totalorder %s28, %s31
      %p37 = scmp.eq.s32.totalorder %s18, 0
      %p38 = por %p36, %p37
      %p39 = scmp.ne.s32.totalorder %s28, %s31
      %p40 = scmp.eq.s32.totalorder %s23, 1
      %p41 = por %p39, %p40
      %p42 = scmp.ne.s32.totalorder %s31, %s32
      %p43 = scmp.eq.s32.totalorder %s23, 0
      %p44 = por %p42, %p43
      %p45 = scmp.ne.s32.totalorder %s31, %s32
      %p46 = scmp.eq.s32.totalorder %s24, 1
      %p47 = por %p45, %p46
      %p49 = scmp.ne.s32.totalorder %s32, %s48
      %p50 = scmp.eq.s32.totalorder %s24, 0
      %p51 = por %p49, %p50
      %s53 = sadd.s32 %s52, 1
      %p56 = scmp.eq.s32.totalorder %s18, 1
      %p57 = scmp.ne.s32.totalorder %s52, %s54
      %p58 = scmp.eq.s32.totalorder %s18, 0
      %p59 = por %p57, %p58
      %p60 = scmp.ne.s32.totalorder %s52, %s54
      %p61 = scmp.eq.s32.totalorder %s23, 1
      %p62 = por %p60, %p61
      %p63 = scmp.ne.s32.totalorder %s54, %s55
      %p64 = scmp.eq.s32.totalorder %s23, 0
      %p65 = por %p63, %p64
      %p66 = scmp.ne.s32.totalorder %s54, %s55
      %p67 = scmp.eq.s32.totalorder %s24, 1
      %p68 = por %p66, %p67
      %p70 = scmp.ne.s32.totalorder %s55, %s69
      %p71 = scmp.eq.s32.totalorder %s24, 0
      %p72 = por %p70, %p71
      %s74 = sadd.s32 %s73, 1
      %p77 = scmp.eq.s32.totalorder %s18, 1
      %p78 = scmp.ne.s32.totalorder %s73, %s75
      %p79 = scmp.eq.s32.totalorder %s18, 0
      %p80 = por %p78, %p79
      %p81 = scmp.ne.s32.totalorder %s73, %s75
      %p82 = scmp.eq.s32.totalorder %s23, 1
      %p83 = por %p81, %p82
      %p84 = scmp.ne.s32.totalorder %s75, %s76
      %p85 = scmp.eq.s32.totalorder %s23, 0
      %p86 = por %p84, %p85
      %p87 = scmp.ne.s32.totalorder %s75, %s76
      %p88 = scmp.eq.s32.totalorder %s24, 1
      %p89 = por %p87, %p88
      %p91 = scmp.ne.s32.totalorder %s76, %s90
      %p92 = scmp.eq.s32.totalorder %s24, 0
      %p93 = por %p91, %p92
      %s95 = sadd.s32 %s94, 1
      %p98 = scmp.eq.s32.totalorder %s18, 1
      %p99 = scmp.ne.s32.totalorder %s94, %s96
      %p100 = scmp.eq.s32.totalorder %s18, 0
      %p101 = por %p99, %p100
      %p102 = scmp.ne.s32.totalorder %s94, %s96
      %p103 = scmp.eq.s32.totalorder %s23, 1
      %p104 = por %p102, %p103
      %p105 = scmp.ne.s32.totalorder %s96, %s97
      %p106 = scmp.eq.s32.totalorder %s23, 0
      %p107 = por %p105, %p106
      %p108 = scmp.ne.s32.totalorder %s96, %s97
      %p109 = scmp.eq.s32.totalorder %s24, 1
      %p110 = por %p108, %p109
      %p112 = scmp.ne.s32.totalorder %s97, %s111
      %p113 = scmp.eq.s32.totalorder %s24, 0
      %p114 = por %p112, %p113
      %s116 = sadd.s32 %s115, 1
      %p119 = scmp.eq.s32.totalorder %s18, 1
      %p120 = scmp.ne.s32.totalorder %s115, %s117
      %p121 = scmp.eq.s32.totalorder %s18, 0
      %p122 = por %p120, %p121
      %p123 = scmp.ne.s32.totalorder %s115, %s117
      %p124 = scmp.eq.s32.totalorder %s23, 1
      %p125 = por %p123, %p124
      %p126 = scmp.ne.s32.totalorder %s117, %s118
      %p127 = scmp.eq.s32.totalorder %s23, 0
      %p128 = por %p126, %p127
      %p129 = scmp.ne.s32.totalorder %s117, %s118
      %p130 = scmp.eq.s32.totalorder %s24, 1
      %p131 = por %p129, %p130
      %p133 = scmp.ne.s32.totalorder %s118, %s132
      %p134 = scmp.eq.s32.totalorder %s24, 0
      %p135 = por %p133, %p134
      %s137 = sadd.s32 %s136, 1
      %p140 = scmp.eq.s32.totalorder %s18, 1
      %p141 = scmp.ne.s32.totalorder %s136, %s138
      %p142 = scmp.eq.s32.totalorder %s18, 0
      %p143 = por %p141, %p142
      %p144 = scmp.ne.s32.totalorder %s136, %s138
      %p145 = scmp.eq.s32.totalorder %s23, 1
      %p146 = por %p144, %p145
      %p147 = scmp.ne.s32.totalorder %s138, %s139
      %p148 = scmp.eq.s32.totalorder %s23, 0
      %p149 = por %p147, %p148
      %p150 = scmp.ne.s32.totalorder %s138, %s139
      %p151 = scmp.eq.s32.totalorder %s24, 1
      %p152 = por %p150, %p151
      %p154 = scmp.ne.s32.totalorder %s139, %s153
      %p155 = scmp.eq.s32.totalorder %s24, 0
      %p156 = por %p154, %p155
      %s158 = sadd.s32 %s157, 1
      %p161 = scmp.eq.s32.totalorder %s18, 1
      %p162 = scmp.ne.s32.totalorder %s157, %s159
      %p163 = scmp.eq.s32.totalorder %s18, 0
      %p164 = por %p162, %p163
      %p165 = scmp.ne.s32.totalorder %s157, %s159
      %p166 = scmp.eq.s32.totalorder %s23, 1
      %p167 = por %p165, %p166
      %p168 = scmp.ne.s32.totalorder %s159, %s160
      %p169 = scmp.eq.s32.totalorder %s23, 0
      %p170 = por %p168, %p169
      %p171 = scmp.ne.s32.totalorder %s159, %s160
      %p172 = scmp.eq.s32.totalorder %s24, 1
      %p173 = por %p171, %p172
      %p175 = scmp.ne.s32.totalorder %s160, %s174
      %p176 = scmp.eq.s32.totalorder %s24, 0
      %p177 = por %p175, %p176
      %s178 = ssub.s32 %s18, %s25
      %p179 = scmp.eq.s32.totalorder %s178, 0
      %s181 = sadd.s32 %s180, 1
      %s182 = scalar_select %p179, %s180, %s181
      %p185 = pneg %p179
      %p186 = scmp.eq.s32.totalorder %s18, 1
      %p187 = por %p185, %p186
      %p188 = scmp.ne.s32.totalorder %s180, %s183
      %p189 = scmp.eq.s32.totalorder %s18, 0
      %p190 = por %p188, %p189
      %p191 = scmp.ne.s32.totalorder %s180, %s183
      %p192 = scmp.eq.s32.totalorder %s23, 1
      %p193 = por %p191, %p192
      %p194 = scmp.ne.s32.totalorder %s183, %s184
      %p195 = scmp.eq.s32.totalorder %s23, 0
      %p196 = por %p194, %p195
      %p197 = scmp.ne.s32.totalorder %s183, %s184
      %p198 = scmp.eq.s32.totalorder %s24, 1
      %p199 = por %p197, %p198
      %p201 = scmp.ne.s32.totalorder %s184, %s200
      %p202 = scmp.eq.s32.totalorder %s24, 0
      %p203 = por %p201, %p202
      %p204 = scmp.le.s32.totalorder 1, %s18
      %p205 = scmp.lt.s32.totalorder %s18, 3
      %p206 = pnand %p204, %p205
      %p207 = pneg %p206
      // Predicated region
      $region9: #{tpu_custom_call.1} parent=5 // pred_check
        _
      $region10: #{tpu_custom_call.1} parent=5 // pred_check_branch
        %209 = sbr.rel (%p206) target = $region12
      $region11: #{tpu_custom_call.1} parent=5 // pred_region
        %s210 = ssub.s32 %s18, 1
        // Predicated region
        $region13: #{tpu_custom_call.1} parent=11 // pred_check
          %p211 = pneg %p65
        $region14: #{tpu_custom_call.1} parent=11 // pred_check_branch
          %213 = sbr.rel (%p211) target = $region16
        $region15: #{tpu_custom_call.1} parent=11 // pred_region
          _
        $region16: #{tpu_custom_call.1} parent=11 // pred_fallthru
          _
        // Predicated region
        $region17: #{tpu_custom_call.1} parent=11 // pred_check
          %p214 = pneg %p86
        $region18: #{tpu_custom_call.1} parent=11 // pred_check_branch
          %216 = sbr.rel (%p214) target = $region20
        $region19: #{tpu_custom_call.1} parent=11 // pred_region
          _
        $region20: #{tpu_custom_call.1} parent=11 // pred_fallthru
          _
        // Predicated region
        $region21: #{tpu_custom_call.1} parent=11 // pred_check
          %p217 = pneg %p107
        $region22: #{tpu_custom_call.1} parent=11 // pred_check_branch
          %219 = sbr.rel (%p217) target = $region24
        $region23: #{tpu_custom_call.1} parent=11 // pred_region
          _
        $region24: #{tpu_custom_call.1} parent=11 // pred_fallthru
          _
        // Predicated region
        $region25: #{tpu_custom_call.1} parent=11 // pred_check
          %p220 = pneg %p128
        $region26: #{tpu_custom_call.1} parent=11 // pred_check_branch
          %222 = sbr.rel (%p220) target = $region28
        $region27: #{tpu_custom_call.1} parent=11 // pred_region
          _
        $region28: #{tpu_custom_call.1} parent=11 // pred_fallthru
          _
        // Predicated region
        $region29: #{tpu_custom_call.1} parent=11 // pred_check
          %p223 = pneg %p149
        $region30: #{tpu_custom_call.1} parent=11 // pred_check_branch
          %225 = sbr.rel (%p223) target = $region32
        $region31: #{tpu_custom_call.1} parent=11 // pred_region
          _
        $region32: #{tpu_custom_call.1} parent=11 // pred_fallthru
          _
        // Predicated region
        $region33: #{tpu_custom_call.1} parent=11 // pred_check
          %p226 = pneg %p170
        $region34: #{tpu_custom_call.1} parent=11 // pred_check_branch
          %228 = sbr.rel (%p226) target = $region36
        $region35: #{tpu_custom_call.1} parent=11 // pred_region
          _
        $region36: #{tpu_custom_call.1} parent=11 // pred_fallthru
          _
      $region12: #{tpu_custom_call.1} parent=5 // pred_fallthru
        _
      %p229 = scmp.lt.s32.totalorder %s18, 2
      // Predicated region
      $region37: #{tpu_custom_call.1} parent=5 // pred_check
        %p230 = pneg %p229
      $region38: #{tpu_custom_call.1} parent=5 // pred_check_branch
        %232 = sbr.rel (%p230) target = $region40
      $region39: #{tpu_custom_call.1} parent=5 // pred_region
        // Predicated region
        $region41: #{tpu_custom_call.1} parent=39 // pred_check
          %p233 = pneg %p38
        $region42: #{tpu_custom_call.1} parent=39 // pred_check_branch
          %235 = sbr.rel (%p233) target = $region44
        $region43: #{tpu_custom_call.1} parent=39 // pred_region
          %p236 = scmp.lt.s32.totalorder %s18, 1
          %s237 = scalar_select %p236, %s18, 1
          %s238 = smul.addr %s237, 8
          %s239 = scalar_lea.vmem %s0, %s238
        $region44: #{tpu_custom_call.1} parent=39 // pred_fallthru
          _
      $region40: #{tpu_custom_call.1} parent=5 // pred_fallthru
        _
      %p240 = scmp.le.s32.totalorder 1, %s18
      %p241 = scmp.lt.s32.totalorder %s18, 3
      %p242 = pnand %p240, %p241
      %p243 = pneg %p242
      // Predicated region
      $region45: #{tpu_custom_call.1} parent=5 // pred_check
        _
      $region46: #{tpu_custom_call.1} parent=5 // pred_check_branch
        %245 = sbr.rel (%p242) target = $region48
      $region47: #{tpu_custom_call.1} parent=5 // pred_region
        %s246 = ssub.s32 %s18, 1
        %p247 = scmp.lt.s32.totalorder %s23, 1
        %s248 = scalar_select %p247, %s23, 1
        %s249 = smul.addr %s248, 8
        %s250 = scalar_lea.vmem %s0, %s249
        %p251 = pneg %p44
        %p252 = pneg %p41
        %p253 = pneg %p65
        %p254 = pneg %p62
        %p255 = pneg %p86
        %p256 = pneg %p83
        %p257 = pneg %p107
        %p258 = pneg %p104
        %p259 = pneg %p128
        %p260 = pneg %p125
        %p261 = pneg %p149
        %p262 = pneg %p146
        %p263 = pneg %p170
        %p264 = pneg %p167
        %p265 = pneg %p196
        %p266 = pneg %p193
        %s267 = sand.u32 %s183, 1
        %s268 = scalar_lea.sflag [#allocation4], %s267
        %s269 = sand.u32 %s183, 1
        %s270 = scalar_lea.vmem [#allocation3], %s269
        %p271 = scmp.lt.s32.totalorder %s23, 1
        %s272 = scalar_select %p271, %s23, 1
        %s273 = smul.addr %s272, 8
        %s274 = scalar_lea.vmem %s0, %s273
        %v276 = vld [vmem:[%s274] sm:$0xff]
        %v277 = vpack.c.bf16 %v276, %v276
        %v278 = vld [vmem:[%s1] sm:$0xf]
        %v279 = vld [vmem:[%s1 + $0x4] sm:$0xf]
        %v280 = vld [vmem:[%s1 + $0x8] sm:$0xf]
        %v281 = vld [vmem:[%s1 + $0xc] sm:$0xf]
        %v282 = vld [vmem:[%s1 + $0x10] sm:$0xf]
        %v283 = vld [vmem:[%s1 + $0x14] sm:$0xf]
        %v284 = vld [vmem:[%s1 + $0x18] sm:$0xf]
        %v285 = vld [vmem:[%s1 + $0x1c] sm:$0xf]
        %v286 = vld [vmem:[%s1 + $0x20] sm:$0xf]
        %v287 = vld [vmem:[%s1 + $0x24] sm:$0xf]
        %v288 = vld [vmem:[%s1 + $0x28] sm:$0xf]
        %v289 = vld [vmem:[%s1 + $0x2c] sm:$0xf]
        %v290 = vld [vmem:[%s1 + $0x30] sm:$0xf]
        %v291 = vld [vmem:[%s1 + $0x34] sm:$0xf]
        %v292 = vld [vmem:[%s1 + $0x38] sm:$0xf]
        %v293 = vld [vmem:[%s1 + $0x3c] sm:$0xf]
        %v294 = vld [vmem:[%s2] sm:$0xff]
        %v295 = vld [vmem:[%s2 + $0x8] sm:$0xff]
        %v296 = vld [vmem:[%s2 + $0x10] sm:$0xff]
        %v297 = vld [vmem:[%s2 + $0x18] sm:$0xff]
        %v298 = vld [vmem:[%s2 + $0x20] sm:$0xff]
        %v299 = vld [vmem:[%s2 + $0x28] sm:$0xff]
        %v300 = vld [vmem:[%s2 + $0x30] sm:$0xff]
        %v301 = vld [vmem:[%s2 + $0x38] sm:$0xff]
        %v302 = vld [vmem:[%s2 + $0x40] sm:$0xff]
        %v303 = vld [vmem:[%s2 + $0x48] sm:$0xff]
        %v304 = vld [vmem:[%s2 + $0x50] sm:$0xff]
        %v305 = vld [vmem:[%s2 + $0x58] sm:$0xff]
        %v306 = vld [vmem:[%s2 + $0x60] sm:$0xff]
        %v307 = vld [vmem:[%s2 + $0x68] sm:$0xff]
        %v308 = vld [vmem:[%s2 + $0x70] sm:$0xff]
        %v309 = vld [vmem:[%s2 + $0x78] sm:$0xff]
        %311 = vset.pattern.permute.xlu0 0
        %312 = vperm.xlu0 %311, %v294
        %v313 = vpop.permute.xlu0 %312
        %316 = vset.pattern.permute.xlu0 0
        %317 = vperm.xlu0 %316, %v295
        %v318 = vpop.permute.xlu0 %317
        %321 = vset.pattern.permute.xlu0 0
        %322 = vperm.xlu0 %321, %v296
        %v323 = vpop.permute.xlu0 %322
        %326 = vset.pattern.permute.xlu0 0
        %327 = vperm.xlu0 %326, %v297
        %v328 = vpop.permute.xlu0 %327
        %331 = vset.pattern.permute.xlu0 0
        %332 = vperm.xlu0 %331, %v298
        %v333 = vpop.permute.xlu0 %332
        %336 = vset.pattern.permute.xlu0 0
        %337 = vperm.xlu0 %336, %v299
        %v338 = vpop.permute.xlu0 %337
        %341 = vset.pattern.permute.xlu0 0
        %342 = vperm.xlu0 %341, %v300
        %v343 = vpop.permute.xlu0 %342
        %346 = vset.pattern.permute.xlu0 0
        %347 = vperm.xlu0 %346, %v301
        %v348 = vpop.permute.xlu0 %347
        %351 = vset.pattern.permute.xlu0 0
        %352 = vperm.xlu0 %351, %v302
        %v353 = vpop.permute.xlu0 %352
        %356 = vset.pattern.permute.xlu0 0
        %357 = vperm.xlu0 %356, %v303
        %v358 = vpop.permute.xlu0 %357
        %361 = vset.pattern.permute.xlu0 0
        %362 = vperm.xlu0 %361, %v304
        %v363 = vpop.permute.xlu0 %362
        %366 = vset.pattern.permute.xlu0 0
        %367 = vperm.xlu0 %366, %v305
        %v368 = vpop.permute.xlu0 %367
        %371 = vset.pattern.permute.xlu0 0
        %372 = vperm.xlu0 %371, %v306
        %v373 = vpop.permute.xlu0 %372
        %376 = vset.pattern.permute.xlu0 0
        %377 = vperm.xlu0 %376, %v307
        %v378 = vpop.permute.xlu0 %377
        %381 = vset.pattern.permute.xlu0 0
        %382 = vperm.xlu0 %381, %v308
        %v383 = vpop.permute.xlu0 %382
        %386 = vset.pattern.permute.xlu0 0
        %387 = vperm.xlu0 %386, %v309
        %v388 = vpop.permute.xlu0 %387
        %v406 = vunpack.c.l.b16 %v278
        %v407 = vunpack.c.l.b16 %v279
        %v408 = vunpack.c.l.b16 %v280
        %v409 = vunpack.c.l.b16 %v281
        %v410 = vunpack.c.l.b16 %v282
        %v411 = vunpack.c.l.b16 %v283
        %v412 = vunpack.c.l.b16 %v284
        %v413 = vunpack.c.l.b16 %v285
        %v414 = vunpack.c.l.b16 %v286
        %v415 = vunpack.c.l.b16 %v287
        %v416 = vunpack.c.l.b16 %v288
        %v417 = vunpack.c.l.b16 %v289
        %v418 = vunpack.c.l.b16 %v290
        %v419 = vunpack.c.l.b16 %v291
        %v420 = vunpack.c.l.b16 %v292
        %v421 = vunpack.c.l.b16 %v293
        %v422 = vpack.c.b16 %v407, %v406
        %v423 = vpack.c.b16 %v409, %v408
        %v424 = vpack.c.b16 %v411, %v410
        %v425 = vpack.c.b16 %v413, %v412
        %v426 = vpack.c.b16 %v415, %v414
        %v427 = vpack.c.b16 %v417, %v416
        %v428 = vpack.c.b16 %v419, %v418
        %v429 = vpack.c.b16 %v421, %v420
        %vm430 = vcmask 261120
        %v432 = vsel %vm430, %v422, 0
        %v435 = vsel %vm430, %v423, 0
        %v438 = vsel %vm430, %v424, 0
        %v441 = vsel %vm430, %v425, 0
        %v444 = vsel %vm430, %v426, 0
        %v447 = vsel %vm430, %v427, 0
        %v450 = vsel %vm430, %v428, 0
        %v453 = vsel %vm430, %v429, 0
        %v456 = vsel %vm430, %v277, 0
        %458 = vmatpush.bf16.xpose.msra.mxu0 0
        %459 = vmatpush.bf16.xpose.msra.mxu0 0
        %460 = vmatpush.bf16.xpose.msra.mxu0 0
        %461 = vmatpush.bf16.xpose.msra.mxu0 0
        %462 = vmatpush.bf16.xpose.msra.mxu0 0
        %463 = vmatpush.bf16.xpose.msra.mxu0 0
        %464 = vmatpush.bf16.xpose.msra.mxu0 0
        %465 = vmatpush.bf16.xpose.msra.mxu0 %v456
        %466 = vmatmul.bf16.gmra.mxu0 %v432
        %v467 = vpop.f32.mrf.mxu0
        %v468 = vadd.f32 %v313, %v467
        %v469 = vpop.f32.mrf.mxu0
        %v470 = vadd.f32 %v318, %v469
        %471 = vmatmul.bf16.gmra.mxu0 %v435
        %v472 = vpop.f32.mrf.mxu0
        %v473 = vadd.f32 %v323, %v472
        %v474 = vpop.f32.mrf.mxu0
        %v475 = vadd.f32 %v328, %v474
        %476 = vmatmul.bf16.gmra.mxu0 %v438
        %v477 = vpop.f32.mrf.mxu0
        %v478 = vadd.f32 %v333, %v477
        %v479 = vpop.f32.mrf.mxu0
        %v480 = vadd.f32 %v338, %v479
        %481 = vmatmul.bf16.gmra.mxu0 %v441
        %v482 = vpop.f32.mrf.mxu0
        %v483 = vadd.f32 %v343, %v482
        %v484 = vpop.f32.mrf.mxu0
        %v485 = vadd.f32 %v348, %v484
        %486 = vmatmul.bf16.gmra.mxu0 %v444
        %v487 = vpop.f32.mrf.mxu0
        %v488 = vadd.f32 %v353, %v487
        %v489 = vpop.f32.mrf.mxu0
        %v490 = vadd.f32 %v358, %v489
        %491 = vmatmul.bf16.gmra.mxu0 %v447
        %v492 = vpop.f32.mrf.mxu0
        %v493 = vadd.f32 %v363, %v492
        %v494 = vpop.f32.mrf.mxu0
        %v495 = vadd.f32 %v368, %v494
        %496 = vmatmul.bf16.gmra.mxu0 %v450
        %v497 = vpop.f32.mrf.mxu0
        %v498 = vadd.f32 %v373, %v497
        %v499 = vpop.f32.mrf.mxu0
        %v500 = vadd.f32 %v378, %v499
        %501 = vmatmul.bf16.gmra.mxu0 %v453
        %v502 = vpop.f32.mrf.mxu0
        %v503 = vadd.f32 %v383, %v502
        %v504 = vpop.f32.mrf.mxu0
        %v505 = vadd.f32 %v388, %v504
        %506 = vdwg.mxu0
        %v507 = vmax.f32 %v468, 0.0
        %v508 = vmax.f32 %v470, 0.0
        %v509 = vmax.f32 %v473, 0.0
        %v510 = vmax.f32 %v475, 0.0
        %v511 = vmax.f32 %v478, 0.0
        %v512 = vmax.f32 %v480, 0.0
        %v513 = vmax.f32 %v483, 0.0
        %v514 = vmax.f32 %v485, 0.0
        %v515 = vmax.f32 %v488, 0.0
        %v516 = vmax.f32 %v490, 0.0
        %v517 = vmax.f32 %v493, 0.0
        %v518 = vmax.f32 %v495, 0.0
        %v519 = vmax.f32 %v498, 0.0
        %v520 = vmax.f32 %v500, 0.0
        %v521 = vmax.f32 %v503, 0.0
        %v522 = vmax.f32 %v505, 0.0
        %v523 = vld [vmem:[%s3] sm:$0xf]
        %v524 = vld [vmem:[%s3 + $0x4] sm:$0xf]
        %v525 = vld [vmem:[%s3 + $0x8] sm:$0xf]
        %v526 = vld [vmem:[%s3 + $0xc] sm:$0xf]
        %v527 = vld [vmem:[%s3 + $0x10] sm:$0xf]
        %v528 = vld [vmem:[%s3 + $0x14] sm:$0xf]
        %v529 = vld [vmem:[%s3 + $0x18] sm:$0xf]
        %v530 = vld [vmem:[%s3 + $0x1c] sm:$0xf]
        %v531 = vpack.c.bf16 %v508, %v507
        %v532 = vpack.c.bf16 %v510, %v509
        %v533 = vpack.c.bf16 %v512, %v511
        %v534 = vpack.c.bf16 %v514, %v513
        %v535 = vpack.c.bf16 %v516, %v515
        %v536 = vpack.c.bf16 %v518, %v517
        %v537 = vpack.c.bf16 %v520, %v519
        %v538 = vpack.c.bf16 %v522, %v521
        %v539 = vld [vmem:[%s4] sm:$0xff]
        %v540 = vld [vmem:[%s4 + $0x8] sm:$0xff]
        %v541 = vld [vmem:[%s4 + $0x10] sm:$0xff]
        %v542 = vld [vmem:[%s4 + $0x18] sm:$0xff]
        %v543 = vld [vmem:[%s4 + $0x20] sm:$0xff]
        %v544 = vld [vmem:[%s4 + $0x28] sm:$0xff]
        %v545 = vld [vmem:[%s4 + $0x30] sm:$0xff]
        %v546 = vld [vmem:[%s4 + $0x38] sm:$0xff]
        %548 = vset.pattern.permute.xlu0 0
        %549 = vperm.xlu0 %548, %v539
        %v550 = vpop.permute.xlu0 %549
        %553 = vset.pattern.permute.xlu0 0
        %554 = vperm.xlu0 %553, %v540
        %v555 = vpop.permute.xlu0 %554
        %558 = vset.pattern.permute.xlu0 0
        %559 = vperm.xlu0 %558, %v541
        %v560 = vpop.permute.xlu0 %559
        %563 = vset.pattern.permute.xlu0 0
        %564 = vperm.xlu0 %563, %v542
        %v565 = vpop.permute.xlu0 %564
        %568 = vset.pattern.permute.xlu0 0
        %569 = vperm.xlu0 %568, %v543
        %v570 = vpop.permute.xlu0 %569
        %573 = vset.pattern.permute.xlu0 0
        %574 = vperm.xlu0 %573, %v544
        %v575 = vpop.permute.xlu0 %574
        %578 = vset.pattern.permute.xlu0 0
        %579 = vperm.xlu0 %578, %v545
        %v580 = vpop.permute.xlu0 %579
        %583 = vset.pattern.permute.xlu0 0
        %584 = vperm.xlu0 %583, %v546
        %v585 = vpop.permute.xlu0 %584
        %v595 = vunpack.c.l.b16 %v523
        %v596 = vunpack.c.l.b16 %v524
        %v597 = vunpack.c.l.b16 %v525
        %v598 = vunpack.c.l.b16 %v526
        %v599 = vunpack.c.l.b16 %v527
        %v600 = vunpack.c.l.b16 %v528
        %v601 = vunpack.c.l.b16 %v529
        %v602 = vunpack.c.l.b16 %v530
        %v603 = vpack.c.b16 %v596, %v595
        %v604 = vpack.c.b16 %v598, %v597
        %v605 = vpack.c.b16 %v600, %v599
        %v606 = vpack.c.b16 %v602, %v601
        %611 = vmatpush.bf16.msra.mxu0 %v538
        %612 = vmatpush.bf16.msra.mxu0 %v537
        %613 = vmatpush.bf16.msra.mxu0 %v536
        %614 = vmatpush.bf16.msra.mxu0 %v535
        %615 = vmatpush.bf16.msra.mxu0 %v534
        %616 = vmatpush.bf16.msra.mxu0 %v533
        %617 = vmatpush.bf16.msra.mxu0 %v532
        %618 = vmatpush.bf16.msra.mxu0 %v531
        %619 = vmatmul.bf16.gmra.mxu0 %v603
        %v620 = vpop.f32.mrf.mxu0
        %v621 = vadd.f32 %v550, %v620
        %v622 = vpop.f32.mrf.mxu0
        %v623 = vadd.f32 %v555, %v622
        %624 = vmatmul.bf16.gmra.mxu0 %v604
        %v625 = vpop.f32.mrf.mxu0
        %v626 = vadd.f32 %v560, %v625
        %v627 = vpop.f32.mrf.mxu0
        %v628 = vadd.f32 %v565, %v627
        %629 = vmatmul.bf16.gmra.mxu0 %v605
        %v630 = vpop.f32.mrf.mxu0
        %v631 = vadd.f32 %v570, %v630
        %v632 = vpop.f32.mrf.mxu0
        %v633 = vadd.f32 %v575, %v632
        %634 = vmatmul.bf16.gmra.mxu0 %v606
        %v635 = vpop.f32.mrf.mxu0
        %v636 = vadd.f32 %v580, %v635
        %v637 = vpop.f32.mrf.mxu0
        %v638 = vadd.f32 %v585, %v637
        %639 = vdwg.mxu0
        %v640 = vmax.f32 %v621, 0.0
        %v641 = vmax.f32 %v623, 0.0
        %v642 = vmax.f32 %v626, 0.0
        %v643 = vmax.f32 %v628, 0.0
        %v644 = vmax.f32 %v631, 0.0
        %v645 = vmax.f32 %v633, 0.0
        %v646 = vmax.f32 %v636, 0.0
        %v647 = vmax.f32 %v638, 0.0
        %v648 = vld [vmem:[%s5] sm:$0xff]
        %v649 = vld [vmem:[%s5 + $0x8] sm:$0xff]
        %v650 = vld [vmem:[%s5 + $0x10] sm:$0xff]
        %v651 = vld [vmem:[%s5 + $0x18] sm:$0xff]
        %v652 = vld [vmem:[%s5 + $0x20] sm:$0xff]
        %v653 = vld [vmem:[%s5 + $0x28] sm:$0xff]
        %v654 = vld [vmem:[%s5 + $0x30] sm:$0xff]
        %v655 = vld [vmem:[%s5 + $0x38] sm:$0xff]
        %657 = vset.pattern.permute.xlu0 0
        %658 = vperm.xlu0 %657, %v648
        %v659 = vpop.permute.xlu0 %658
        %662 = vset.pattern.permute.xlu0 0
        %663 = vperm.xlu0 %662, %v649
        %v664 = vpop.permute.xlu0 %663
        %667 = vset.pattern.permute.xlu0 0
        %668 = vperm.xlu0 %667, %v650
        %v669 = vpop.permute.xlu0 %668
        %672 = vset.pattern.permute.xlu0 0
        %673 = vperm.xlu0 %672, %v651
        %v674 = vpop.permute.xlu0 %673
        %677 = vset.pattern.permute.xlu0 0
        %678 = vperm.xlu0 %677, %v652
        %v679 = vpop.permute.xlu0 %678
        %682 = vset.pattern.permute.xlu0 0
        %683 = vperm.xlu0 %682, %v653
        %v684 = vpop.permute.xlu0 %683
        %687 = vset.pattern.permute.xlu0 0
        %688 = vperm.xlu0 %687, %v654
        %v689 = vpop.permute.xlu0 %688
        %692 = vset.pattern.permute.xlu0 0
        %693 = vperm.xlu0 %692, %v655
        %v694 = vpop.permute.xlu0 %693
        %v696 = vmul.f32 %v640, %v659
        %v697 = vmul.f32 %v641, %v664
        %v698 = vmul.f32 %v642, %v669
        %v699 = vmul.f32 %v643, %v674
        %v700 = vmul.f32 %v644, %v679
        %v701 = vmul.f32 %v645, %v684
        %v702 = vmul.f32 %v646, %v689
        %v703 = vmul.f32 %v647, %v694
        %vm704 = vcmask 64512
        %v705 = vsel %vm704, %v696, 0.0
        %v706 = vsel %vm704, %v697, 0.0
        %v707 = vadd.f32 %v705, %v706
        %v708 = vsel %vm704, %v698, 0.0
        %v709 = vadd.f32 %v707, %v708
        %v710 = vsel %vm704, %v699, 0.0
        %v711 = vadd.f32 %v709, %v710
        %v712 = vsel %vm704, %v700, 0.0
        %v713 = vadd.f32 %v711, %v712
        %v714 = vsel %vm704, %v701, 0.0
        %v715 = vadd.f32 %v713, %v714
        %v716 = vsel %vm704, %v702, 0.0
        %v717 = vadd.f32 %v715, %v716
        %v718 = vsel %vm704, %v703, 0.0
        %v719 = vadd.f32 %v717, %v718
        %v720 = vrot.slane %v719, 4
        %v721 = vadd.f32 %v719, %v720
        %v722 = vrot.slane %v721, 2
        %v723 = vadd.f32 %v721, %v722
        %v724 = vrot.slane %v723, 1
        %v725 = vadd.f32 %v723, %v724
        %v726 = vld [vmem:[#allocation2] sm:$0x1]
        %728 = vset.pattern.permute.xlu0 0
        %729 = vperm.xlu0 %728, %v726
        %v730 = vpop.permute.xlu0 %729
        %v732 = vperm.slane %v730, 0
        %v733 = vadd.f32 %v725, %v732
        %v734 = vxor.u32 %v733, 2147483648
        %v735 = vmul.f32 %v734, 1.442695
        %v736 = vpow.pop %v735
        %v737 = vadd.f32 %v736, 1.0
        %v738 = vrcp.pop %v737
        %v739 = vmul.f32 %v737, %v738
        %v740 = vsub.f32 1.0, %v739
        %v741 = vmul.f32 %v738, %v740
        %v742 = vadd.f32 %v738, %v741
        %vm743 = vweird.f32 %v737
        %vm744 = vweird.f32 %v738
        %vm745 = vmor %vm743, %vm744
        %v746 = vsel %vm745, %v738, %v742
        %v747 = vand.u32 2147483647, %v737
        %vm748 = vcmp.eq.f32.partialorder %v747, 8.507059e+37
        %v749 = vand.u32 %v737, 2147483648
        %v750 = vor.u32 1.1754944e-38, %v749
        %v751 = vsel %vm748, %v750, %v746
        %v752 = vmul.f32 1.0, %v751
        %vm753 = vcmask 57344
        %754 = vst.msk [vmem:[%s270] sm:$0x1] %vm753, %v752
        %s755 = sand.u32 %s183, 1
        %s756 = scalar_lea.sflag [#allocation4], %s755
        %s757 = sand.u32 %s183, 1
        %s758 = scalar_lea.vmem [#allocation3], %s757
        // Predicated region
        $region49: #{tpu_custom_call.1} parent=47 // pred_check
          %p759 = pneg %p193
        $region50: #{tpu_custom_call.1} parent=47 // pred_check_branch
          %761 = sbr.rel (%p759) target = $region52
        $region51: #{tpu_custom_call.1} parent=47 // pred_region
          %763 = vsyncadd %s756, 0
          %s764 = scalar_lea.hbm %s7, %s23
          %s766 = sshll.u32 %s758, 4
          %s767 = int_to_ptr.vmem [resolvable:$true] %s766
          %s768 = sshll.u32 %s764, 4
          %s769 = int_to_ptr.hbm [resolvable:$true] %s768
          %771 = dma.vmem_to_hbm [thread:$0]  %s767, 16, %s769, %s756
        $region52: #{tpu_custom_call.1} parent=47 // pred_fallthru
          _
      $region48: #{tpu_custom_call.1} parent=5 // pred_fallthru
        _
      %p772 = scmp.le.s32.totalorder 2, %s18
      // Predicated region
      $region53: #{tpu_custom_call.1} parent=5 // pred_check
        %p773 = pneg %p772
      $region54: #{tpu_custom_call.1} parent=5 // pred_check_branch
        %775 = sbr.rel (%p773) target = $region56
      $region55: #{tpu_custom_call.1} parent=5 // pred_region
        %s776 = ssub.s32 %s18, 2
        // Predicated region
        $region57: #{tpu_custom_call.1} parent=55 // pred_check
          %p777 = pneg %p199
        $region58: #{tpu_custom_call.1} parent=55 // pred_check_branch
          %779 = sbr.rel (%p777) target = $region60
        $region59: #{tpu_custom_call.1} parent=55 // pred_region
          %s780 = sand.u32 %s184, 1
          %s781 = scalar_lea.sflag [#allocation4], %s780
          %s782 = sand.u32 %s184, 1
          %s783 = scalar_lea.vmem [#allocation3], %s782
          %785 = dma.done %s781, 16
        $region60: #{tpu_custom_call.1} parent=55 // pred_fallthru
          _
      $region56: #{tpu_custom_call.1} parent=5 // pred_fallthru
        _
    $region6: #{tpu_custom_call.1} parent=1 // loop_footer
      %s22 = sadd.s32 1, %s18
    $region7: #{tpu_custom_call.1} parent=1 // loop_footer_branch
      %17 = sbr.rel target = $region3
    $region8: #{tpu_custom_call.1} parent=1 // loop_exit
      _
    %786 = vsyncpa [#allocation4], 1
    %s787 = scalar_lea.sflag [#allocation4], 1
    %788 = vsyncpa %s787, 1

</llo_original>
